<compile_context>
chip_gen: v7x
topology: tpu7x:2x2x1
jax: 0.10.0
libtpu: 0.0.40
codegen_flags: <defaults>
</compile_context>

<pallas_src>
import numpy as np
import jax
import jax.numpy as jnp
from jax.experimental import pallas as pl
from jax.experimental.pallas import tpu as pltpu

# ---------------- config (small, consistent with the module) ----------------
IMG = 16          # img_size
PATCH = 4         # patch_size
IN_CHANS = 3      # in_chans (module default)
EMBED = 32        # embed_dim
BATCH = 2

HO = IMG // PATCH
WO = IMG // PATCH
L = HO * WO                         # num_patches
K = IN_CHANS * PATCH * PATCH        # im2col depth


# ---------------- Pallas kernel ----------------------------------------------
def _patch_embed_kernel(p_ref, w_ref, b_ref, o_ref):
    # One image per grid step.
    #   p_ref: (1, L, K) im2col patches of this image
    #   w_ref: (K, E)    GEMM weight   (VMEM-resident across steps)
    #   b_ref: (1, E)    bias          (VMEM-resident across steps)
    #   o_ref: (1, L, E)
    y = jnp.dot(p_ref[0], w_ref[...], preferred_element_type=jnp.float32)
    o_ref[0] = y + b_ref[0]


# ---------------- wrapper ------------------------------------------------------
def patch_embed_pallas(x, w, b):
    """x: (B, Cin, H, W) f32; w: (E, Cin, ph, pw) conv weight; b: (E,) bias."""
    B, Cin, H, W = x.shape
    assert H == IMG and W == IMG, "input image size doesn't match model"
    assert Cin == IN_CHANS

    # im2col (pure permutation -> XLA glue):
    # (B, Cin, Ho, ph, Wo, pw) -> (B, Ho, Wo, Cin, ph, pw) -> (B, L, K)
    patches = x.reshape(B, Cin, HO, PATCH, WO, PATCH)
    patches = patches.transpose(0, 2, 4, 1, 3, 5).reshape(B, L, K)

    # conv weight (E, Cin, ph, pw) -> GEMM weight (K, E); same K ordering as im2col
    w_mat = w.reshape(EMBED, K).T
    b_row = b.reshape(1, EMBED)

    full = lambda shp: pl.BlockSpec(shp, lambda i: tuple(0 for _ in shp))
    y = pl.pallas_call(
        _patch_embed_kernel,
        out_shape=jax.ShapeDtypeStruct((B, L, EMBED), jnp.float32),
        grid=(B,),
        in_specs=[
            pl.BlockSpec((1, L, K), lambda i: (i, 0, 0)),   # per-image patches
            full((K, EMBED)),                               # resident weight
            full((1, EMBED)),                               # resident bias
        ],
        out_specs=pl.BlockSpec((1, L, EMBED), lambda i: (i, 0, 0)),
        compiler_params=pltpu.CompilerParams(
            dimension_semantics=("parallel",)),
    )(patches, w_mat, b_row)

    # The PyTorch forward then does flatten(2).transpose(1, 2) a second time:
    # flatten(2) is a no-op on the 3-D tensor, transpose gives (B, E, L).
    # TODO(synk): norm_layer defaults to None; as written the module's double
    # transpose would apply LayerNorm(embed_dim) over the patch axis, so the
    # optional norm branch is not implemented.
    return jnp.swapaxes(y, 1, 2)


# ---------------- pure-JAX reference (mirrors the PyTorch code) ----------------
def ref_forward(x, w, b):
    y = jax.lax.conv_general_dilated(
        x, w, window_strides=(PATCH, PATCH), padding="VALID",
        dimension_numbers=("NCHW", "OIHW", "NCHW"))
    y = y + b[None, :, None, None]                 # (B, E, Ho, Wo)
    B = x.shape[0]
    y = y.reshape(B, EMBED, HO * WO)               # flatten(2)
    y = jnp.swapaxes(y, 1, 2)                      # transpose(1, 2) -> (B, L, E)
    # second flatten(2) is a no-op on 3-D; second transpose(1, 2):
    y = jnp.swapaxes(y, 1, 2)                      # -> (B, E, L)
    return y


# ---------------- main ----------------------------------------------------------
if __name__ == "__main__":
    key = jax.random.PRNGKey(0)
    kx, kw, kb = jax.random.split(key, 3)
    x = jax.random.normal(kx, (BATCH, IN_CHANS, IMG, IMG), dtype=jnp.float32)
    w = (0.02 * jax.random.normal(kw, (EMBED, IN_CHANS, PATCH, PATCH))).astype(jnp.float32)
    b = (0.02 * jax.random.normal(kb, (EMBED,))).astype(jnp.float32)

    out = jax.jit(patch_embed_pallas)(x, w, b)
    out = jax.block_until_ready(out)

    ref = jax.block_until_ready(ref_forward(x, w, b))

    assert out.shape == (BATCH, EMBED, L)
    np.testing.assert_allclose(np.asarray(out), np.asarray(ref), rtol=1e-4, atol=1e-4)
    print("KERNEL_OK")
</pallas_src>

<mosaic_0001>
module attributes {stable_mosaic.version = 11 : i64} {
  func.func @_patch_embed_kernel(%arg0: i32, %arg1: memref<1x16x48xf32, #tpu.memory_space<vmem>>, %arg2: memref<48x32xf32, #tpu.memory_space<vmem>>, %arg3: memref<1x32xf32, #tpu.memory_space<vmem>>, %arg4: memref<1x16x32xf32, #tpu.memory_space<vmem>>) attributes {dimension_semantics = [#tpu.dimension_semantics<parallel>], iteration_bounds = array<i64: 2>, scalar_prefetch = 0 : i64, scratch_operands = 0 : i64, tpu.core_type = #tpu.core_type<tc>, window_params = [{transform_indices = @transform_0, window_bounds = array<i64: 1, 16, 48>}, {pipeline_mode = #tpu.pipeline_mode<synchronous>, transform_indices = @transform_1, window_bounds = array<i64: 48, 32>}, {pipeline_mode = #tpu.pipeline_mode<synchronous>, transform_indices = @transform_2, window_bounds = array<i64: 1, 32>}, {transform_indices = @transform_3, window_bounds = array<i64: 1, 16, 32>}]} {
    %c0 = arith.constant 0 : index
    %c0_0 = arith.constant 0 : index
    %c0_1 = arith.constant 0 : index
    %0 = vector.load %arg1[%c0, %c0_0, %c0_1] : memref<1x16x48xf32, #tpu.memory_space<vmem>>, vector<1x16x48xf32>
    %1 = vector.shape_cast %0 : vector<1x16x48xf32> to vector<16x48xf32>
    %c0_2 = arith.constant 0 : index
    %c0_3 = arith.constant 0 : index
    %2 = vector.load %arg2[%c0_2, %c0_3] : memref<48x32xf32, #tpu.memory_space<vmem>>, vector<48x32xf32>
    %cst = arith.constant dense<0.000000e+00> : vector<16x32xf32>
    %3 = tpu.matmul %1, %2, %cst {dimension_numbers = #tpu.dot_dimension_numbers<[1], [0], [0], [1], [0, 0, 1, 1], [], []>} : vector<16x48xf32>, vector<48x32xf32>, vector<16x32xf32> -> vector<16x32xf32>
    %c0_4 = arith.constant 0 : index
    %c0_5 = arith.constant 0 : index
    %4 = vector.load %arg3[%c0_4, %c0_5] : memref<1x32xf32, #tpu.memory_space<vmem>>, vector<1x32xf32>
    %5 = vector.shape_cast %4 : vector<1x32xf32> to vector<32xf32>
    %6 = vector.shape_cast %5 : vector<32xf32> to vector<1x32xf32>
    %7 = vector.broadcast %6 : vector<1x32xf32> to vector<16x32xf32>
    %8 = arith.addf %3, %7 : vector<16x32xf32>
    %c0_6 = arith.constant 0 : index
    %c0_7 = arith.constant 0 : index
    %c0_8 = arith.constant 0 : index
    %9 = vector.load %arg4[%c0_6, %c0_7, %c0_8] : memref<1x16x32xf32, #tpu.memory_space<vmem>>, vector<1x16x32xf32>
    %10 = vector.shape_cast %9 : vector<1x16x32xf32> to vector<16x32xf32>
    %11 = vector.shape_cast %8 : vector<16x32xf32> to vector<1x16x32xf32>
    tpu.vector_store %arg4[%c0_6, %c0_7, %c0_8], %11 {strides = array<i32>} : memref<1x16x32xf32, #tpu.memory_space<vmem>>, vector<1x16x32xf32>,
    return
  }
  func.func @transform_0(%arg0: i32) -> (i32, i32, i32) {
    %c0_i32 = arith.constant 0 : i32
    %c0_i32_0 = arith.constant 0 : i32
    %c0_i32_1 = arith.constant 0 : i32
    return %arg0, %c0_i32, %c0_i32_0 : i32, i32, i32
  }
  func.func @transform_1(%arg0: i32) -> (i32, i32) {
    %c0_i32 = arith.constant 0 : i32
    %c0_i32_0 = arith.constant 0 : i32
    %c0_i32_1 = arith.constant 0 : i32
    return %c0_i32, %c0_i32_0 : i32, i32
  }
  func.func @transform_2(%arg0: i32) -> (i32, i32) {
    %c0_i32 = arith.constant 0 : i32
    %c0_i32_0 = arith.constant 0 : i32
    %c0_i32_1 = arith.constant 0 : i32
    return %c0_i32, %c0_i32_0 : i32, i32
  }
  func.func @transform_3(%arg0: i32) -> (i32, i32, i32) {
    %c0_i32 = arith.constant 0 : i32
    %c0_i32_0 = arith.constant 0 : i32
    %c0_i32_1 = arith.constant 0 : i32
    return %arg0, %c0_i32, %c0_i32_0 : i32, i32, i32
  }
}

</mosaic_0001>

<llo_original>
// kernel: patch_embed_pallas.1
$region0: #{patch_embed_pallas.1}
  #allocation0 [shape = 'u32[]', space=smem, size = 0x4, offset = 0x4, fixed_abs, tag = 'smem constant byte address 0x4 - core index']
  #allocation1 [shape = 'u32[144,128]{1,0:T(1,128)}', space=vmem, size = 0x12000, scoped, tag = 'internal scratch']
  %s0 = inlined_call_operand.vmem [shape: f32[2,16,48], index: 0, kind: input, shape index: {}]
  %s1 = inlined_call_operand.vmem [shape: f32[48,32], index: 1, kind: input, shape index: {}]
  %s2 = inlined_call_operand.vmem [shape: f32[1,32], index: 2, kind: input, shape index: {}]
  %s3 = inlined_call_operand.hbm [shape: f32[2,16,32], index: 3, kind: output, shape index: {}]
  %s4 = sld [smem:[#allocation0]]
  $region45: #{patch_embed_pallas.1} parent=0
    _
  %s6 = ssub.s32 1, %s4
  %s7 = scalar_select 0, %s6, %s4
  $region1: #{patch_embed_pallas.1} parent=0
    #allocation2 [shape = 'u8[16384]{0}', space=vmem, size = 0x4000, scoped, tag = 'output window, operand 0']
    #allocation3 [shape = 's32[2]{0}', space=sflag, size = 0x8, scoped, tag = 'scoped memory for patch_embed_pallas.1']
    %8 = vsyncpa [#allocation3], 0
    %s9 = scalar_lea.sflag [#allocation3], 1
    %10 = vsyncpa %s9, 0
    loop: start=0, step=1, limit=4
    $region2: #{patch_embed_pallas.1} parent=1 // loop_pre_header
      _
    $region3: #{patch_embed_pallas.1} parent=1 // loop_header
      %s12 = sphi 0, %s16
      %p13 = scmp.ge.s32.totalorder %s12, 4
      %s22 = sphi 0, %s24
      %s25 = sphi 0, %s22
      %s26 = sphi 0, %s25
      %s42 = sphi 0, %s26
      %s46 = sphi 0, %s46
      %s48 = sphi 0, %s46
      %s49 = sphi 0, %s48
      %s63 = sphi 0, %s49
      %s67 = sphi 0, %s67
      %s69 = sphi 0, %s67
      %s70 = sphi 0, %s69
      %s84 = sphi 0, %s70
      %s90 = sphi 0, %s92
      %s93 = sphi 0, %s90
      %s94 = sphi 0, %s93
      %s110 = sphi 0, %s94
    $region4: #{patch_embed_pallas.1} parent=1 // loop_header_branch
      %15 = sbr.rel (%p13) target = $region8
    $region5: #{patch_embed_pallas.1} parent=1 // loop_body
      %s17 = ssub.s32 %s12, 1
      %s18 = ssub.s32 %s12, 2
      %s19 = sadd.s32 %s12, 1
      %s20 = ssub.s32 %s12, %s19
      %p21 = scmp.eq.s32.totalorder %s20, 0
      %s23 = sadd.s32 %s22, 1
      %s24 = scalar_select %p21, %s22, %s23
      %p27 = pneg %p21
      %p28 = scmp.eq.s32.totalorder %s12, 1
      %p29 = por %p27, %p28
      %p30 = scmp.ne.s32.totalorder %s22, %s25
      %p31 = scmp.eq.s32.totalorder %s12, 0
      %p32 = por %p30, %p31
      %p33 = scmp.ne.s32.totalorder %s22, %s25
      %p34 = scmp.eq.s32.totalorder %s17, 1
      %p35 = por %p33, %p34
      %p36 = scmp.ne.s32.totalorder %s25, %s26
      %p37 = scmp.eq.s32.totalorder %s17, 0
      %p38 = por %p36, %p37
      %p39 = scmp.ne.s32.totalorder %s25, %s26
      %p40 = scmp.eq.s32.totalorder %s18, 1
      %p41 = por %p39, %p40
      %p43 = scmp.ne.s32.totalorder %s26, %s42
      %p44 = scmp.eq.s32.totalorder %s18, 0
      %p45 = por %p43, %p44
      %s47 = sadd.s32 %s46, 1
      %p50 = scmp.eq.s32.totalorder %s12, 1
      %p51 = scmp.ne.s32.totalorder %s46, %s48
      %p52 = scmp.eq.s32.totalorder %s12, 0
      %p53 = por %p51, %p52
      %p54 = scmp.ne.s32.totalorder %s46, %s48
      %p55 = scmp.eq.s32.totalorder %s17, 1
      %p56 = por %p54, %p55
      %p57 = scmp.ne.s32.totalorder %s48, %s49
      %p58 = scmp.eq.s32.totalorder %s17, 0
      %p59 = por %p57, %p58
      %p60 = scmp.ne.s32.totalorder %s48, %s49
      %p61 = scmp.eq.s32.totalorder %s18, 1
      %p62 = por %p60, %p61
      %p64 = scmp.ne.s32.totalorder %s49, %s63
      %p65 = scmp.eq.s32.totalorder %s18, 0
      %p66 = por %p64, %p65
      %s68 = sadd.s32 %s67, 1
      %p71 = scmp.eq.s32.totalorder %s12, 1
      %p72 = scmp.ne.s32.totalorder %s67, %s69
      %p73 = scmp.eq.s32.totalorder %s12, 0
      %p74 = por %p72, %p73
      %p75 = scmp.ne.s32.totalorder %s67, %s69
      %p76 = scmp.eq.s32.totalorder %s17, 1
      %p77 = por %p75, %p76
      %p78 = scmp.ne.s32.totalorder %s69, %s70
      %p79 = scmp.eq.s32.totalorder %s17, 0
      %p80 = por %p78, %p79
      %p81 = scmp.ne.s32.totalorder %s69, %s70
      %p82 = scmp.eq.s32.totalorder %s18, 1
      %p83 = por %p81, %p82
      %p85 = scmp.ne.s32.totalorder %s70, %s84
      %p86 = scmp.eq.s32.totalorder %s18, 0
      %p87 = por %p85, %p86
      %s88 = ssub.s32 %s12, %s19
      %p89 = scmp.eq.s32.totalorder %s88, 0
      %s91 = sadd.s32 %s90, 1
      %s92 = scalar_select %p89, %s90, %s91
      %p95 = pneg %p89
      %p96 = scmp.eq.s32.totalorder %s12, 1
      %p97 = por %p95, %p96
      %p98 = scmp.ne.s32.totalorder %s90, %s93
      %p99 = scmp.eq.s32.totalorder %s12, 0
      %p100 = por %p98, %p99
      %p101 = scmp.ne.s32.totalorder %s90, %s93
      %p102 = scmp.eq.s32.totalorder %s17, 1
      %p103 = por %p101, %p102
      %p104 = scmp.ne.s32.totalorder %s93, %s94
      %p105 = scmp.eq.s32.totalorder %s17, 0
      %p106 = por %p104, %p105
      %p107 = scmp.ne.s32.totalorder %s93, %s94
      %p108 = scmp.eq.s32.totalorder %s18, 1
      %p109 = por %p107, %p108
      %p111 = scmp.ne.s32.totalorder %s94, %s110
      %p112 = scmp.eq.s32.totalorder %s18, 0
      %p113 = por %p111, %p112
      %p114 = scmp.le.s32.totalorder 1, %s12
      %p115 = scmp.lt.s32.totalorder %s12, 3
      %p116 = pnand %p114, %p115
      %p117 = pneg %p116
      // Predicated region
      $region9: #{patch_embed_pallas.1} parent=5 // pred_check
        _
      $region10: #{patch_embed_pallas.1} parent=5 // pred_check_branch
        %119 = sbr.rel (%p116) target = $region12
      $region11: #{patch_embed_pallas.1} parent=5 // pred_region
        %s120 = ssub.s32 %s12, 1
        // Predicated region
        $region13: #{patch_embed_pallas.1} parent=11 // pred_check
          %p121 = pneg %p59
        $region14: #{patch_embed_pallas.1} parent=11 // pred_check_branch
          %123 = sbr.rel (%p121) target = $region16
        $region15: #{patch_embed_pallas.1} parent=11 // pred_region
          _
        $region16: #{patch_embed_pallas.1} parent=11 // pred_fallthru
          _
        // Predicated region
        $region17: #{patch_embed_pallas.1} parent=11 // pred_check
          %p124 = pneg %p80
        $region18: #{patch_embed_pallas.1} parent=11 // pred_check_branch
          %126 = sbr.rel (%p124) target = $region20
        $region19: #{patch_embed_pallas.1} parent=11 // pred_region
          _
        $region20: #{patch_embed_pallas.1} parent=11 // pred_fallthru
          _
      $region12: #{patch_embed_pallas.1} parent=5 // pred_fallthru
        _
      %p127 = scmp.lt.s32.totalorder %s12, 2
      // Predicated region
      $region21: #{patch_embed_pallas.1} parent=5 // pred_check
        %p128 = pneg %p127
      $region22: #{patch_embed_pallas.1} parent=5 // pred_check_branch
        %130 = sbr.rel (%p128) target = $region24
      $region23: #{patch_embed_pallas.1} parent=5 // pred_region
        // Predicated region
        $region25: #{patch_embed_pallas.1} parent=23 // pred_check
          %p131 = pneg %p32
        $region26: #{patch_embed_pallas.1} parent=23 // pred_check_branch
          %133 = sbr.rel (%p131) target = $region28
        $region27: #{patch_embed_pallas.1} parent=23 // pred_region
          %p134 = scmp.lt.s32.totalorder %s12, 1
          %s135 = scalar_select %p134, %s12, 1
          %s136 = smul.addr %s135, 2
          %s137 = smul.addr %s136, 8
          %s138 = scalar_lea.vmem %s0, %s137
        $region28: #{patch_embed_pallas.1} parent=23 // pred_fallthru
          _
      $region24: #{patch_embed_pallas.1} parent=5 // pred_fallthru
        _
      %p139 = scmp.le.s32.totalorder 1, %s12
      %p140 = scmp.lt.s32.totalorder %s12, 3
      %p141 = pnand %p139, %p140
      %p142 = pneg %p141
      // Predicated region
      $region29: #{patch_embed_pallas.1} parent=5 // pred_check
        _
      $region30: #{patch_embed_pallas.1} parent=5 // pred_check_branch
        %144 = sbr.rel (%p141) target = $region32
      $region31: #{patch_embed_pallas.1} parent=5 // pred_region
        %s145 = ssub.s32 %s12, 1
        %p146 = scmp.lt.s32.totalorder %s17, 1
        %s147 = scalar_select %p146, %s17, 1
        %s148 = smul.addr %s147, 2
        %s149 = smul.addr %s148, 8
        %s150 = scalar_lea.vmem %s0, %s149
        %p151 = pneg %p38
        %p152 = pneg %p35
        %p153 = pneg %p59
        %p154 = pneg %p56
        %p155 = pneg %p80
        %p156 = pneg %p77
        %p157 = pneg %p106
        %p158 = pneg %p103
        %s159 = sand.u32 %s93, 1
        %s160 = scalar_lea.sflag [#allocation3], %s159
        %s161 = sand.u32 %s93, 1
        %s162 = smul.addr %s161, 16
        %s163 = scalar_lea.vmem [#allocation2], %s162
        %p164 = scmp.lt.s32.totalorder %s17, 1
        %s165 = scalar_select %p164, %s17, 1
        %s166 = smul.addr %s165, 2
        %s167 = smul.addr %s166, 8
        %s168 = scalar_lea.vmem %s0, %s167
        %v169 = vld [vmem:[%s168] sm:$0xff]
        %v170 = vld [vmem:[%s168 + $0x8] sm:$0xff]
        %v171 = vld [vmem:[%s1] sm:$0xff]
        %v172 = vld [vmem:[%s1 + $0x8] sm:$0xff]
        %v173 = vld [vmem:[%s1 + $0x10] sm:$0xff]
        %v174 = vld [vmem:[%s1 + $0x18] sm:$0xff]
        %v175 = vld [vmem:[%s1 + $0x20] sm:$0xff]
        %v176 = vld [vmem:[%s1 + $0x28] sm:$0xff]
        %v177 = vld [vmem:[%s2] sm:$0x1]
        %v179 = vlaneseq
        %v180 = vshrl.u32 %v179, 7
        %v181 = vsub.s32 0, %v180
        %v182 = vrot.slane %v177, %v181
        %vm184 = vcmask 392192
        %v186 = vsel %vm184, %v169, 0
        %v189 = vsel %vm184, %v170, 0
        %191 = vmatprep.subr.mxu0 0.0
        %192 = vmatpush1.msra.mxu0 %v171
        %193 = vmatprep.subr.mxu0 0.0
        %194 = vmatpush1.msra.mxu0 %v172
        %195 = vmatprep.subr.mxu0 0.0
        %196 = vmatpush1.msra.mxu0 %v173
        %197 = vmatprep.subr.mxu0 0.0
        %198 = vmatpush1.msra.mxu0 %v174
        %199 = vmatprep.subr.mxu0 0.0
        %200 = vmatpush1.msra.mxu0 %v175
        %201 = vmatprep.subr.mxu0 0.0
        %202 = vmatpush1.msra.mxu0 %v176
        %203 = vmatprep.subr.mxu0 0.0
        %204 = vmatpush1.msra.mxu0 0.0
        %205 = vmatprep.subr.mxu0 0.0
        %206 = vmatpush1.msra.mxu0 0.0
        %207 = vmatprep.subr.mxu0 0.0
        %208 = vmatpush1.msra.mxu0 0.0
        %209 = vmatprep.subr.mxu0 0.0
        %210 = vmatpush1.msra.mxu0 0.0
        %211 = vmatprep.subr.mxu0 0.0
        %212 = vmatpush1.msra.mxu0 0.0
        %213 = vmatprep.subr.mxu0 0.0
        %214 = vmatpush1.msra.mxu0 0.0
        %215 = vmatprep.subr.mxu0 0.0
        %216 = vmatpush1.msra.mxu0 0.0
        %217 = vmatprep.subr.mxu0 0.0
        %218 = vmatpush1.msra.mxu0 0.0
        %219 = vmatprep.subr.mxu0 0.0
        %220 = vmatpush1.msra.mxu0 0.0
        %221 = vmatprep.subr.mxu0 0.0
        %222 = vmatpush1.msra.mxu0 0.0
        %223 = vmatprep.subr.mxu0 0.0
        %224 = vmatpush1.msra.mxu0 0.0
        %225 = vmatprep.subr.mxu0 0.0
        %226 = vmatpush1.msra.mxu0 0.0
        %227 = vmatprep.subr.mxu0 0.0
        %228 = vmatpush1.msra.mxu0 0.0
        %229 = vmatprep.subr.mxu0 0.0
        %230 = vmatpush1.msra.mxu0 0.0
        %231 = vmatprep.subr.mxu0 0.0
        %232 = vmatpush1.msra.mxu0 0.0
        %233 = vmatprep.subr.mxu0 0.0
        %234 = vmatpush1.msra.mxu0 0.0
        %235 = vmatprep.subr.mxu0 0.0
        %236 = vmatpush1.msra.mxu0 0.0
        %237 = vmatprep.subr.mxu0 0.0
        %238 = vmatpush1.msra.mxu0 0.0
        %239 = vmatprep.subr.mxu0 0.0
        %240 = vmatpush1.msra.mxu0 0.0
        %241 = vmatprep.subr.mxu0 0.0
        %242 = vmatpush1.msra.mxu0 0.0
        %243 = vmatprep.subr.mxu0 0.0
        %244 = vmatpush1.msra.mxu0 0.0
        %245 = vmatprep.subr.mxu0 0.0
        %246 = vmatpush1.msra.mxu0 0.0
        %247 = vmatprep.subr.mxu0 0.0
        %248 = vmatpush1.msra.mxu0 0.0
        %249 = vmatprep.subr.mxu0 0.0
        %250 = vmatpush1.msra.mxu0 0.0
        %251 = vmatprep.subr.mxu0 0.0
        %252 = vmatpush1.msra.mxu0 0.0
        %253 = vmatprep.subr.mxu0 0.0
        %254 = vmatpush1.msra.mxu0 0.0
        %255 = vmatprep.mubr.f32.mxu0 0.0
        %256 = vmatmul.mubr.f32.gmra.mrb[0].mxu0 %v186
        %v257 = vpop.f32.mrb[0].mxu0
        %v258 = vadd.f32 %v182, %v257
        %v259 = vpop.f32.mrb[0].mxu0
        %260 = vmatprep.mubr.f32.mxu0 0.0
        %261 = vmatmul.mubr.f32.gmra.mrb[0].mxu0 %v189
        %v262 = vpop.f32.mrb[0].mxu0
        %v263 = vadd.f32 %v182, %v262
        %v264 = vpop.f32.mrb[0].mxu0
        %265 = vdwg.mxu0
        %vm266 = vcmask 261120
        %267 = vst.msk [vmem:[%s163] sm:$0xff] %vm266, %v258
        %268 = vst.msk [vmem:[%s163 + $0x8] sm:$0xff] %vm266, %v263
        %s269 = sand.u32 %s93, 1
        %s270 = scalar_lea.sflag [#allocation3], %s269
        %s271 = sand.u32 %s93, 1
        %s272 = smul.addr %s271, 16
        %s273 = scalar_lea.vmem [#allocation2], %s272
        // Predicated region
        $region33: #{patch_embed_pallas.1} parent=31 // pred_check
          %p274 = pneg %p103
        $region34: #{patch_embed_pallas.1} parent=31 // pred_check_branch
          %276 = sbr.rel (%p274) target = $region36
        $region35: #{patch_embed_pallas.1} parent=31 // pred_region
          %s278 = ssub.s32 256, 256
          %279 = vsyncadd %s270, %s278
          %s280 = smul.addr %s17, 2
          %s281 = smul.addr %s280, 128
          %s282 = scalar_lea.hbm %s3, %s281
          %s283 = sshll.u32 %s273, 4
          %s284 = int_to_ptr.vmem [resolvable:$true] %s283
          %289 = dma.vmem_to_hbm [thread:$0]  %s284, 256, %s282, %s270, 128, 128, 8
        $region36: #{patch_embed_pallas.1} parent=31 // pred_fallthru
          _
      $region32: #{patch_embed_pallas.1} parent=5 // pred_fallthru
        _
      %p290 = scmp.le.s32.totalorder 2, %s12
      // Predicated region
      $region37: #{patch_embed_pallas.1} parent=5 // pred_check
        %p291 = pneg %p290
      $region38: #{patch_embed_pallas.1} parent=5 // pred_check_branch
        %293 = sbr.rel (%p291) target = $region40
      $region39: #{patch_embed_pallas.1} parent=5 // pred_region
        %s294 = ssub.s32 %s12, 2
        // Predicated region
        $region41: #{patch_embed_pallas.1} parent=39 // pred_check
          %p295 = pneg %p109
        $region42: #{patch_embed_pallas.1} parent=39 // pred_check_branch
          %297 = sbr.rel (%p295) target = $region44
        $region43: #{patch_embed_pallas.1} parent=39 // pred_region
          %s298 = sand.u32 %s94, 1
          %s299 = scalar_lea.sflag [#allocation3], %s298
          %s300 = sand.u32 %s94, 1
          %s301 = smul.addr %s300, 16
          %s302 = scalar_lea.vmem [#allocation2], %s301
          %303 = dma.done %s299, 256
        $region44: #{patch_embed_pallas.1} parent=39 // pred_fallthru
          _
      $region40: #{patch_embed_pallas.1} parent=5 // pred_fallthru
        _
    $region6: #{patch_embed_pallas.1} parent=1 // loop_footer
      %s16 = sadd.s32 1, %s12
    $region7: #{patch_embed_pallas.1} parent=1 // loop_footer_branch
      %11 = sbr.rel target = $region3
    $region8: #{patch_embed_pallas.1} parent=1 // loop_exit
      _
    %304 = vsyncpa [#allocation3], 1
    %s305 = scalar_lea.sflag [#allocation3], 1
    %306 = vsyncpa %s305, 1

</llo_original>
